<compile_context>
chip_gen: v5e
topology: v5e:2x2
jax: 0.10.0
libtpu: 0.0.40
codegen_flags: <defaults>
</compile_context>

<pallas_src>
import functools

import jax
import jax.numpy as jnp
from jax.experimental import pallas as pl
from jax.experimental.pallas import tpu as pltpu

_LANE = 128
# ~10 MiB working set at the largest tiles; 32 MiB is safe on every generation
# including v7x (64 MiB physical VMEM).
_VMEM_LIMIT = 32 * 1024 * 1024


def _round_up(x, m):
    return ((x + m - 1) // m) * m


def _pad2(a, rows, cols):
    return jnp.pad(a, ((0, rows - a.shape[0]), (0, cols - a.shape[1])))


def _plan_tiles(num_nodes):
    """Return (n_pad, tm, tk) with tm | n_pad and tk | n_pad."""
    n_small = _round_up(num_nodes, _LANE)
    if n_small <= 512:
        # Tiny graph: single fully fused VMEM-resident kernel (tm/tk unused).
        return n_small, n_small, n_small
    n_pad = _round_up(num_nodes, 512)
    # Row tile: as large as possible but keep >= 2 row tiles so the "parallel"
    # grid axis can split across both TensorCores on v7x.
    tm = 256
    for cand in (1024, 512):
        if cand <= n_pad // 2 and n_pad % cand == 0:
            tm = cand
            break
    # Reduction tile: as large as divides n_pad (amortizes per-step overhead).
    tk = 512
    for cand in (2048, 1024):
        if n_pad % cand == 0:
            tk = cand
            break
    return n_pad, tm, tk


# ----------------------------- Pallas kernels -------------------------------

def _gcn_layer_kernel(a_ref, x_ref, w_ref, dinv_i_ref, dinv_k_ref, b_ref,
                      o_ref, acc_ref, *, apply_relu):
    """One GCN layer, fused transform + normalize + aggregate.

    grid = (row tiles i [parallel], reduction tiles k [arbitrary]).
    Computes a tile-row of  act(D^-1/2 (A+I) D^-1/2 @ (X @ W) + b):
      * X @ W computed in-kernel (W resident in VMEM) -> no XW HBM round trip
      * D^-1/2 folded in: column scale applied to the XW tile (cheap, (tk,C)),
        row scale applied once in the epilogue.
    """
    k = pl.program_id(1)

    @pl.when(k == 0)
    def _():
        acc_ref[...] = jnp.zeros_like(acc_ref)

    xw = jnp.dot(x_ref[...], w_ref[...], preferred_element_type=jnp.float32)
    xw = (xw * dinv_k_ref[...]).astype(jnp.bfloat16)          # (tk, Cout_p)
    acc_ref[...] += jnp.dot(a_ref[...], xw,
                            preferred_element_type=jnp.float32)

    @pl.when(k == pl.num_programs(1) - 1)
    def _():
        out = acc_ref[...] * dinv_i_ref[...] + b_ref[...]      # f32 epilogue
        if apply_relu:
            out = jnp.maximum(out, 0.0)
        o_ref[...] = out.astype(o_ref.dtype)


def _gnn_fused_small_kernel(a1_ref, a2_ref, x_ref, w1_ref, w2_ref,
                            d1_ref, d2_ref, b1_ref, b2_ref, o_ref):
    """Whole 2-layer GNN in one call; everything VMEM-resident (n_pad <= 512)."""

    def layer(a_ref, h, w_ref, d_ref, b_ref):
        hw = jnp.dot(h, w_ref[...], preferred_element_type=jnp.float32)
        hw = (hw * d_ref[...]).astype(jnp.bfloat16)
        s = jnp.dot(a_ref[...], hw, preferred_element_type=jnp.float32)
        return s * d_ref[...] + b_ref[...]

    h = layer(a1_ref, x_ref[...], w1_ref, d1_ref, b1_ref)
    h = jnp.maximum(h, 0.0).astype(jnp.bfloat16)
    o_ref[...] = layer(a2_ref, h, w2_ref, d2_ref, b2_ref).astype(o_ref.dtype)


# ------------------------------ pallas_call wrappers -------------------------

def _gcn_layer(a_p, x_p, w_p, dinv_p, bias_p, tm, tk, apply_relu, out_dtype):
    n_pad = a_p.shape[0]
    cin_p = x_p.shape[1]
    cout_p = w_p.shape[1]
    grid = (n_pad // tm, n_pad // tk)
    flops = 2 * n_pad * n_pad * cout_p + 2 * grid[0] * n_pad * cin_p * cout_p
    bytes_accessed = int(
        a_p.size * a_p.dtype.itemsize
        + grid[0] * x_p.size * x_p.dtype.itemsize
        + n_pad * cout_p * jnp.dtype(out_dtype).itemsize)
    return pl.pallas_call(
        functools.partial(_gcn_layer_kernel, apply_relu=apply_relu),
        out_shape=jax.ShapeDtypeStruct((n_pad, cout_p), out_dtype),
        grid=grid,
        in_specs=[
            # NOTE: default double-buffering; bump to pipeline_mode=pl.Buffered(3)
            # on the A spec only if the A-stream DMA is measured as exposed.
            pl.BlockSpec((tm, tk), lambda i, k: (i, k)),          # A tile (bf16)
            pl.BlockSpec((tk, cin_p), lambda i, k: (k, 0)),       # X tile (bf16)
            pl.BlockSpec((cin_p, cout_p), lambda i, k: (0, 0)),   # W (resident)
            pl.BlockSpec((tm, 1), lambda i, k: (i, 0)),           # dinv rows (f32)
            pl.BlockSpec((tk, 1), lambda i, k: (k, 0)),           # dinv cols (f32)
            pl.BlockSpec((1, cout_p), lambda i, k: (0, 0)),       # bias (f32)
        ],
        out_specs=pl.BlockSpec((tm, cout_p), lambda i, k: (i, 0)),
        scratch_shapes=[pltpu.VMEM((tm, cout_p), jnp.float32)],
        compiler_params=pltpu.CompilerParams(
            dimension_semantics=("parallel", "arbitrary"),
            vmem_limit_bytes=_VMEM_LIMIT),
        cost_estimate=pl.CostEstimate(
            flops=flops, transcendentals=0, bytes_accessed=bytes_accessed),
    )(a_p, x_p, w_p, dinv_p, dinv_p, bias_p)


def _gnn_fused_small(a1, a2, x_p, w1_p, w2_p, d1, d2, b1_p, b2_p, out_dtype):
    n_pad = a1.shape[0]
    out_p = w2_p.shape[1]
    return pl.pallas_call(
        _gnn_fused_small_kernel,
        out_shape=jax.ShapeDtypeStruct((n_pad, out_p), out_dtype),
        compiler_params=pltpu.CompilerParams(vmem_limit_bytes=_VMEM_LIMIT),
    )(a1, a2, x_p, w1_p, w2_p, d1, d2, b1_p, b2_p)


# ------------------------------- JAX glue ------------------------------------

def build_adj_padded(edge_index, edge_weight, num_nodes, n_pad):
    """(A + I) built directly at padded size in bf16 (message flows src->dst)."""
    src = edge_index[0]
    dst = edge_index[1]
    a = jnp.zeros((n_pad, n_pad), jnp.bfloat16)
    a = a.at[dst, src].add(edge_weight.astype(jnp.bfloat16))
    diag = jnp.arange(num_nodes, dtype=jnp.int32)
    a = a.at[diag, diag].add(jnp.ones((num_nodes,), jnp.bfloat16))
    return a


def compute_dinv(edge_index, edge_weight, num_nodes, n_pad):
    """D^-1/2 of (A + I) row degrees, from the edge list (O(E), no N^2 pass)."""
    dst = edge_index[1]
    deg = jnp.zeros((n_pad,), jnp.float32)
    deg = deg.at[dst].add(edge_weight.astype(jnp.float32))
    deg = deg.at[jnp.arange(num_nodes, dtype=jnp.int32)].add(1.0)  # self loops
    dinv = jnp.where(deg > 0.0, jax.lax.rsqrt(deg), 0.0)
    return dinv.reshape(n_pad, 1)


def gcn_norm_dense(edge_index, edge_weight, num_nodes):
    """Dense f32 D^{-1/2}(A+I)D^{-1/2} (reference only)."""
    src = edge_index[0]
    dst = edge_index[1]
    a = jnp.zeros((num_nodes, num_nodes), jnp.float32)
    a = a.at[dst, src].add(edge_weight.astype(jnp.float32))
    a = a + jnp.eye(num_nodes, dtype=jnp.float32)
    deg = a.sum(axis=1)
    dinv = jnp.where(deg > 0.0, 1.0 / jnp.sqrt(deg), 0.0)
    return dinv[:, None] * a * dinv[None, :]


def gnn_forward(x, edge_index, edge_attr, params):
    """params = (w1 (Cin,H), b1 (1,H), w2 (H,Cout), b2 (1,Cout))."""
    w1, b1, w2, b2 = params
    n = x.shape[0]
    in_c, hid_c = w1.shape
    out_c = w2.shape[1]

    n_pad, tm, tk = _plan_tiles(n)
    cin_p = _round_up(in_c, _LANE)
    hid_p = _round_up(hid_c, _LANE)
    out_p = _round_up(out_c, _LANE)

    # Raw (A + I) at padded size in bf16; D^-1/2 as small f32 vectors.  The
    # normalization is applied inside the kernels (free VPU filler under a
    # mem/MXU-bound loop) instead of as full N^2 f32 XLA passes.
    a1 = build_adj_padded(edge_index, edge_attr[:, 0], n, n_pad)
    a2 = build_adj_padded(edge_index, edge_attr[:, 1], n, n_pad)
    d1 = compute_dinv(edge_index, edge_attr[:, 0], n, n_pad)
    d2 = compute_dinv(edge_index, edge_attr[:, 1], n, n_pad)

    x_p = _pad2(x, n_pad, cin_p).astype(jnp.bfloat16)
    w1_p = _pad2(w1, cin_p, hid_p).astype(jnp.bfloat16)
    w2_p = _pad2(w2, hid_p, out_p).astype(jnp.bfloat16)
    b1_p = _pad2(b1, 1, hid_p).astype(jnp.float32)
    b2_p = _pad2(b2, 1, out_p).astype(jnp.float32)

    if n_pad <= 512:
        # Tiny graph: both layers fused into a single VMEM-resident call.
        out = _gnn_fused_small(a1, a2, x_p, w1_p, w2_p, d1, d2, b1_p, b2_p,
                               jnp.float32)
    else:
        # Layer 1: H = relu(N1 @ (X @ W1) + b1)   (fused transform+aggregate)
        h = _gcn_layer(a1, x_p, w1_p, d1, b1_p, tm, tk,
                       apply_relu=True, out_dtype=jnp.bfloat16)
        # Layer 2: O = N2 @ (H @ W2) + b2
        out = _gcn_layer(a2, h, w2_p, d2, b2_p, tm, tk,
                         apply_relu=False, out_dtype=jnp.float32)

    return out[:n, :out_c]


def init_params(key, in_channels, hidden_channels, out_channels):
    """Deterministic glorot-uniform weights, zero biases (like PyG GCNConv)."""
    k1, k2 = jax.random.split(key)

    def glorot(k, fan_in, fan_out):
        limit = jnp.sqrt(6.0 / (fan_in + fan_out))
        return jax.random.uniform(
            k, (fan_in, fan_out), jnp.float32, -limit, limit)

    w1 = glorot(k1, in_channels, hidden_channels)
    b1 = jnp.zeros((1, hidden_channels), jnp.float32)
    w2 = glorot(k2, hidden_channels, out_channels)
    b2 = jnp.zeros((1, out_channels), jnp.float32)
    return (w1, b1, w2, b2)


def _ref_forward_bf16(x, edge_index, edge_attr, params, n):
    """Pure-JAX reference mirroring the kernel's bf16 casts / f32 accumulation."""
    w1, b1, w2, b2 = params
    n_pad, _, _ = _plan_tiles(n)
    cin_p = _round_up(w1.shape[0], _LANE)
    hid_p = _round_up(w1.shape[1], _LANE)
    out_p = _round_up(w2.shape[1], _LANE)

    def bf(v):
        return v.astype(jnp.bfloat16).astype(jnp.float32)

    a1 = build_adj_padded(edge_index, edge_attr[:, 0], n, n_pad).astype(jnp.float32)
    a2 = build_adj_padded(edge_index, edge_attr[:, 1], n, n_pad).astype(jnp.float32)
    d1 = compute_dinv(edge_index, edge_attr[:, 0], n, n_pad)
    d2 = compute_dinv(edge_index, edge_attr[:, 1], n, n_pad)

    x_p = bf(_pad2(x, n_pad, cin_p))
    w1_p = bf(_pad2(w1, cin_p, hid_p))
    w2_p = bf(_pad2(w2, hid_p, out_p))
    b1_p = _pad2(b1, 1, hid_p)
    b2_p = _pad2(b2, 1, out_p)

    def layer(a, d, h, w, b):
        hw = bf((h @ w) * d)
        return (a @ hw) * d + b

    h = bf(jnp.maximum(layer(a1, d1, x_p, w1_p, b1_p), 0.0))
    out = layer(a2, d2, h, w2_p, b2_p)
    return out[:n, :w2.shape[1]]


# --------------------------------- main --------------------------------------

if __name__ == "__main__":
    fwd = jax.jit(gnn_forward)

    def run_case(num_nodes, num_edges, in_c, hid_c, out_c, loose_tol):
        key = jax.random.PRNGKey(0)
        kx, ksrc, koff, kw, kp = jax.random.split(key, 5)

        x = jax.random.normal(kx, (num_nodes, in_c), jnp.float32)

        # Random edges with no self loops: dst = (src + offset) % N
        src = jax.random.randint(ksrc, (num_edges,), 0, num_nodes)
        off = jax.random.randint(koff, (num_edges,), 1, num_nodes)
        dst = (src + off) % num_nodes
        edge_index = jnp.stack([src, dst], axis=0).astype(jnp.int32)  # (2, E)

        # Two edge-weight channels (data.edge_attr), positive
        edge_attr = jax.random.uniform(kw, (num_edges, 2), jnp.float32, 0.1, 1.0)

        params = init_params(kp, in_c, hid_c, out_c)

        out = jax.block_until_ready(fwd(x, edge_index, edge_attr, params))
        assert out.shape == (num_nodes, out_c)

        # Tight check against a reference mirroring the kernel's bf16 rounding.
        ref_bf16 = _ref_forward_bf16(x, edge_index, edge_attr, params, num_nodes)
        assert jnp.allclose(out, ref_bf16, atol=3e-3, rtol=3e-3), (
            float(jnp.max(jnp.abs(out - ref_bf16))))

        # Loose check against full-f32 math (bf16 streaming error only).
        a1_f = gcn_norm_dense(edge_index, edge_attr[:, 0], num_nodes)
        a2_f = gcn_norm_dense(edge_index, edge_attr[:, 1], num_nodes)
        w1, b1, w2, b2 = params
        h_f = jnp.maximum(a1_f @ (x @ w1) + b1, 0.0)
        ref_f32 = a2_f @ (h_f @ w2) + b2
        assert jnp.allclose(out, ref_f32, atol=loose_tol, rtol=loose_tol), (
            float(jnp.max(jnp.abs(out - ref_f32))))

    # Tiny graph -> single fully fused VMEM-resident kernel.
    run_case(num_nodes=16, num_edges=40, in_c=4, hid_c=32, out_c=8,
             loose_tol=3e-2)
    # Moderate graph -> tiled path (row x reduction grid), exercises the
    # fused transform + in-kernel normalization + f32 accumulator epilogue.
    run_case(num_nodes=1200, num_edges=3600, in_c=4, hid_c=32, out_c=8,
             loose_tol=5e-2)

    print("KERNEL_OK")
</pallas_src>

<mosaic_0001>
module attributes {stable_mosaic.version = 11 : i64} {
  func.func @_gnn_fused_small_kernel(%arg0: memref<128x128xbf16, #tpu.memory_space<vmem>>, %arg1: memref<128x128xbf16, #tpu.memory_space<vmem>>, %arg2: memref<128x128xbf16, #tpu.memory_space<vmem>>, %arg3: memref<128x128xbf16, #tpu.memory_space<vmem>>, %arg4: memref<128x128xbf16, #tpu.memory_space<vmem>>, %arg5: memref<128x1xf32, #tpu.memory_space<vmem>>, %arg6: memref<128x1xf32, #tpu.memory_space<vmem>>, %arg7: memref<1x128xf32, #tpu.memory_space<vmem>>, %arg8: memref<1x128xf32, #tpu.memory_space<vmem>>, %arg9: memref<128x128xf32, #tpu.memory_space<vmem>>) attributes {dimension_semantics = [], scalar_prefetch = 0 : i64, scratch_operands = 0 : i64, tpu.core_type = #tpu.core_type<tc>} {
    %c0 = arith.constant 0 : index
    %c0_0 = arith.constant 0 : index
    %0 = vector.load %arg2[%c0, %c0_0] : memref<128x128xbf16, #tpu.memory_space<vmem>>, vector<128x128xbf16>
    %c0_1 = arith.constant 0 : index
    %c0_2 = arith.constant 0 : index
    %1 = vector.load %arg3[%c0_1, %c0_2] : memref<128x128xbf16, #tpu.memory_space<vmem>>, vector<128x128xbf16>
    %cst = arith.constant dense<0.000000e+00> : vector<128x128xf32>
    %2 = tpu.matmul %0, %1, %cst {dimension_numbers = #tpu.dot_dimension_numbers<[1], [0], [0], [1], [0, 0, 1, 1], [], []>} : vector<128x128xbf16>, vector<128x128xbf16>, vector<128x128xf32> -> vector<128x128xf32>
    %c0_3 = arith.constant 0 : index
    %c0_4 = arith.constant 0 : index
    %3 = vector.load %arg5[%c0_3, %c0_4] : memref<128x1xf32, #tpu.memory_space<vmem>>, vector<128x1xf32>
    %4 = vector.broadcast %3 : vector<128x1xf32> to vector<128x128xf32>
    %5 = arith.mulf %2, %4 : vector<128x128xf32>
    %6 = arith.truncf %5 : vector<128x128xf32> to vector<128x128xbf16>
    %c0_5 = arith.constant 0 : index
    %c0_6 = arith.constant 0 : index
    %7 = vector.load %arg0[%c0_5, %c0_6] : memref<128x128xbf16, #tpu.memory_space<vmem>>, vector<128x128xbf16>
    %cst_7 = arith.constant dense<0.000000e+00> : vector<128x128xf32>
    %8 = tpu.matmul %7, %6, %cst_7 {dimension_numbers = #tpu.dot_dimension_numbers<[1], [0], [0], [1], [0, 0, 1, 1], [], []>} : vector<128x128xbf16>, vector<128x128xbf16>, vector<128x128xf32> -> vector<128x128xf32>
    %c0_8 = arith.constant 0 : index
    %c0_9 = arith.constant 0 : index
    %9 = vector.load %arg5[%c0_8, %c0_9] : memref<128x1xf32, #tpu.memory_space<vmem>>, vector<128x1xf32>
    %10 = vector.broadcast %9 : vector<128x1xf32> to vector<128x128xf32>
    %11 = arith.mulf %8, %10 : vector<128x128xf32>
    %c0_10 = arith.constant 0 : index
    %c0_11 = arith.constant 0 : index
    %12 = vector.load %arg7[%c0_10, %c0_11] : memref<1x128xf32, #tpu.memory_space<vmem>>, vector<1x128xf32>
    %13 = vector.broadcast %12 : vector<1x128xf32> to vector<128x128xf32>
    %14 = arith.addf %11, %13 : vector<128x128xf32>
    %cst_12 = arith.constant 0.000000e+00 : f32
    %15 = vector.broadcast %cst_12 : f32 to vector<128x128xf32>
    %16 = arith.maximumf %14, %15 : vector<128x128xf32>
    %17 = arith.truncf %16 : vector<128x128xf32> to vector<128x128xbf16>
    %c0_13 = arith.constant 0 : index
    %c0_14 = arith.constant 0 : index
    %18 = vector.load %arg4[%c0_13, %c0_14] : memref<128x128xbf16, #tpu.memory_space<vmem>>, vector<128x128xbf16>
    %cst_15 = arith.constant dense<0.000000e+00> : vector<128x128xf32>
    %19 = tpu.matmul %17, %18, %cst_15 {dimension_numbers = #tpu.dot_dimension_numbers<[1], [0], [0], [1], [0, 0, 1, 1], [], []>} : vector<128x128xbf16>, vector<128x128xbf16>, vector<128x128xf32> -> vector<128x128xf32>
    %c0_16 = arith.constant 0 : index
    %c0_17 = arith.constant 0 : index
    %20 = vector.load %arg6[%c0_16, %c0_17] : memref<128x1xf32, #tpu.memory_space<vmem>>, vector<128x1xf32>
    %21 = vector.broadcast %20 : vector<128x1xf32> to vector<128x128xf32>
    %22 = arith.mulf %19, %21 : vector<128x128xf32>
    %23 = arith.truncf %22 : vector<128x128xf32> to vector<128x128xbf16>
    %c0_18 = arith.constant 0 : index
    %c0_19 = arith.constant 0 : index
    %24 = vector.load %arg1[%c0_18, %c0_19] : memref<128x128xbf16, #tpu.memory_space<vmem>>, vector<128x128xbf16>
    %cst_20 = arith.constant dense<0.000000e+00> : vector<128x128xf32>
    %25 = tpu.matmul %24, %23, %cst_20 {dimension_numbers = #tpu.dot_dimension_numbers<[1], [0], [0], [1], [0, 0, 1, 1], [], []>} : vector<128x128xbf16>, vector<128x128xbf16>, vector<128x128xf32> -> vector<128x128xf32>
    %c0_21 = arith.constant 0 : index
    %c0_22 = arith.constant 0 : index
    %26 = vector.load %arg6[%c0_21, %c0_22] : memref<128x1xf32, #tpu.memory_space<vmem>>, vector<128x1xf32>
    %27 = vector.broadcast %26 : vector<128x1xf32> to vector<128x128xf32>
    %28 = arith.mulf %25, %27 : vector<128x128xf32>
    %c0_23 = arith.constant 0 : index
    %c0_24 = arith.constant 0 : index
    %29 = vector.load %arg8[%c0_23, %c0_24] : memref<1x128xf32, #tpu.memory_space<vmem>>, vector<1x128xf32>
    %30 = vector.broadcast %29 : vector<1x128xf32> to vector<128x128xf32>
    %31 = arith.addf %28, %30 : vector<128x128xf32>
    %c0_25 = arith.constant 0 : index
    %c0_26 = arith.constant 0 : index
    %32 = vector.load %arg9[%c0_25, %c0_26] : memref<128x128xf32, #tpu.memory_space<vmem>>, vector<128x128xf32>
    tpu.vector_store %arg9[%c0_25, %c0_26], %31 {strides = array<i32>} : memref<128x128xf32, #tpu.memory_space<vmem>>, vector<128x128xf32>,
    return
  }
}

</mosaic_0001>

<llo_original>
// kernel: gnn_forward.1
$region0: #{gnn_forward.1}
  #allocation0 [shape = 'u32[]', space=smem, size = 0x4, offset = 0x4, fixed_abs, tag = 'smem constant byte address 0x4 - core index']
  #allocation1 [shape = 'u32[72,128]{1,0:T(1,128)}', space=vmem, size = 0x9000, scoped, tag = 'internal scratch']
  %s0 = inlined_call_operand.vmem [shape: bf16[128,128], index: 0, kind: input, shape index: {}]
  %s1 = inlined_call_operand.vmem [shape: bf16[128,128], index: 1, kind: input, shape index: {}]
  %s2 = inlined_call_operand.vmem [shape: bf16[128,128], index: 2, kind: input, shape index: {}]
  %s3 = inlined_call_operand.vmem [shape: bf16[128,128], index: 3, kind: input, shape index: {}]
  %s4 = inlined_call_operand.vmem [shape: bf16[128,128], index: 4, kind: input, shape index: {}]
  %s5 = inlined_call_operand.vmem [shape: f32[128,1], index: 5, kind: input, shape index: {}]
  %s6 = inlined_call_operand.vmem [shape: f32[128,1], index: 6, kind: input, shape index: {}]
  %s7 = inlined_call_operand.vmem [shape: f32[1,128], index: 7, kind: input, shape index: {}]
  %s8 = inlined_call_operand.vmem [shape: f32[1,128], index: 8, kind: input, shape index: {}]
  %s9 = inlined_call_operand.vmem [shape: f32[128,128], index: 9, kind: output, shape index: {}]
  %s10 = sld [smem:[#allocation0]]
  $region46: #{gnn_forward.1} parent=0
    _
  %s12 = ssub.s32 1, %s10
  %s13 = scalar_select 0, %s12, %s10
  // Predicated region
  $region2: #{gnn_forward.1} parent=0 // pred_check
    _
  $region3: #{gnn_forward.1} parent=0 // pred_check_branch
    %15 = sbr.rel (0) target = $region5
  $region4: #{gnn_forward.1} parent=0 // pred_region
    _
  $region5: #{gnn_forward.1} parent=0 // pred_fallthru
    _
  // Predicated region
  $region6: #{gnn_forward.1} parent=0 // pred_check
    _
  $region7: #{gnn_forward.1} parent=0 // pred_check_branch
    %17 = sbr.rel (0) target = $region9
  $region8: #{gnn_forward.1} parent=0 // pred_region
    _
  $region9: #{gnn_forward.1} parent=0 // pred_fallthru
    _
  // Predicated region
  $region10: #{gnn_forward.1} parent=0 // pred_check
    _
  $region11: #{gnn_forward.1} parent=0 // pred_check_branch
    %19 = sbr.rel (0) target = $region13
  $region12: #{gnn_forward.1} parent=0 // pred_region
    _
  $region13: #{gnn_forward.1} parent=0 // pred_fallthru
    _
  // Predicated region
  $region14: #{gnn_forward.1} parent=0 // pred_check
    _
  $region15: #{gnn_forward.1} parent=0 // pred_check_branch
    %21 = sbr.rel (0) target = $region17
  $region16: #{gnn_forward.1} parent=0 // pred_region
    _
  $region17: #{gnn_forward.1} parent=0 // pred_fallthru
    _
  // Predicated region
  $region18: #{gnn_forward.1} parent=0 // pred_check
    _
  $region19: #{gnn_forward.1} parent=0 // pred_check_branch
    %23 = sbr.rel (0) target = $region21
  $region20: #{gnn_forward.1} parent=0 // pred_region
    _
  $region21: #{gnn_forward.1} parent=0 // pred_fallthru
    _
  // Predicated region
  $region22: #{gnn_forward.1} parent=0 // pred_check
    _
  $region23: #{gnn_forward.1} parent=0 // pred_check_branch
    %25 = sbr.rel (0) target = $region25
  $region24: #{gnn_forward.1} parent=0 // pred_region
    _
  $region25: #{gnn_forward.1} parent=0 // pred_fallthru
    _
  // Predicated region
  $region26: #{gnn_forward.1} parent=0 // pred_check
    _
  $region27: #{gnn_forward.1} parent=0 // pred_check_branch
    %27 = sbr.rel (0) target = $region29
  $region28: #{gnn_forward.1} parent=0 // pred_region
    _
  $region29: #{gnn_forward.1} parent=0 // pred_fallthru
    _
  // Predicated region
  $region30: #{gnn_forward.1} parent=0 // pred_check
    _
  $region31: #{gnn_forward.1} parent=0 // pred_check_branch
    %29 = sbr.rel (0) target = $region33
  $region32: #{gnn_forward.1} parent=0 // pred_region
    _
  $region33: #{gnn_forward.1} parent=0 // pred_fallthru
    _
  // Predicated region
  $region34: #{gnn_forward.1} parent=0 // pred_check
    _
  $region35: #{gnn_forward.1} parent=0 // pred_check_branch
    %31 = sbr.rel (0) target = $region37
  $region36: #{gnn_forward.1} parent=0 // pred_region
    _
  $region37: #{gnn_forward.1} parent=0 // pred_fallthru
    _
  %v32 = vld [vmem:[%s2] sm:$0xf]
  %v33 = vld [vmem:[%s2 + $0x4] sm:$0xf]
  %v34 = vld [vmem:[%s2 + $0x8] sm:$0xf]
  %v35 = vld [vmem:[%s2 + $0xc] sm:$0xf]
  %v36 = vld [vmem:[%s2 + $0x10] sm:$0xf]
  %v37 = vld [vmem:[%s2 + $0x14] sm:$0xf]
  %v38 = vld [vmem:[%s2 + $0x18] sm:$0xf]
  %v39 = vld [vmem:[%s2 + $0x1c] sm:$0xf]
  %v40 = vld [vmem:[%s2 + $0x20] sm:$0xf]
  %v41 = vld [vmem:[%s2 + $0x24] sm:$0xf]
  %v42 = vld [vmem:[%s2 + $0x28] sm:$0xf]
  %v43 = vld [vmem:[%s2 + $0x2c] sm:$0xf]
  %v44 = vld [vmem:[%s2 + $0x30] sm:$0xf]
  %v45 = vld [vmem:[%s2 + $0x34] sm:$0xf]
  %v46 = vld [vmem:[%s2 + $0x38] sm:$0xf]
  %v47 = vld [vmem:[%s2 + $0x3c] sm:$0xf]
  %v48 = vld [vmem:[%s3] sm:$0xf]
  %v49 = vld [vmem:[%s3 + $0x4] sm:$0xf]
  %v50 = vld [vmem:[%s3 + $0x8] sm:$0xf]
  %v51 = vld [vmem:[%s3 + $0xc] sm:$0xf]
  %v52 = vld [vmem:[%s3 + $0x10] sm:$0xf]
  %v53 = vld [vmem:[%s3 + $0x14] sm:$0xf]
  %v54 = vld [vmem:[%s3 + $0x18] sm:$0xf]
  %v55 = vld [vmem:[%s3 + $0x1c] sm:$0xf]
  %v56 = vld [vmem:[%s3 + $0x20] sm:$0xf]
  %v57 = vld [vmem:[%s3 + $0x24] sm:$0xf]
  %v58 = vld [vmem:[%s3 + $0x28] sm:$0xf]
  %v59 = vld [vmem:[%s3 + $0x2c] sm:$0xf]
  %v60 = vld [vmem:[%s3 + $0x30] sm:$0xf]
  %v61 = vld [vmem:[%s3 + $0x34] sm:$0xf]
  %v62 = vld [vmem:[%s3 + $0x38] sm:$0xf]
  %v63 = vld [vmem:[%s3 + $0x3c] sm:$0xf]
  %v80 = vunpack.c.l.b16 %v32
  %v81 = vunpack.c.l.b16 %v33
  %v82 = vunpack.c.l.b16 %v34
  %v83 = vunpack.c.l.b16 %v35
  %v84 = vunpack.c.l.b16 %v36
  %v85 = vunpack.c.l.b16 %v37
  %v86 = vunpack.c.l.b16 %v38
  %v87 = vunpack.c.l.b16 %v39
  %v88 = vunpack.c.l.b16 %v40
  %v89 = vunpack.c.l.b16 %v41
  %v90 = vunpack.c.l.b16 %v42
  %v91 = vunpack.c.l.b16 %v43
  %v92 = vunpack.c.l.b16 %v44
  %v93 = vunpack.c.l.b16 %v45
  %v94 = vunpack.c.l.b16 %v46
  %v95 = vunpack.c.l.b16 %v47
  %v96 = vpack.c.b16 %v81, %v80
  %v97 = vpack.c.b16 %v83, %v82
  %v98 = vpack.c.b16 %v85, %v84
  %v99 = vpack.c.b16 %v87, %v86
  %v100 = vpack.c.b16 %v89, %v88
  %v101 = vpack.c.b16 %v91, %v90
  %v102 = vpack.c.b16 %v93, %v92
  %v103 = vpack.c.b16 %v95, %v94
  %v128 = vunpack.c.l.b16 %v48
  %v129 = vunpack.c.l.b16 %v49
  %v130 = vunpack.c.l.b16 %v50
  %v131 = vunpack.c.l.b16 %v51
  %v132 = vunpack.c.l.b16 %v52
  %v133 = vunpack.c.l.b16 %v53
  %v134 = vunpack.c.l.b16 %v54
  %v135 = vunpack.c.l.b16 %v55
  %v136 = vunpack.c.l.b16 %v56
  %v137 = vunpack.c.l.b16 %v57
  %v138 = vunpack.c.l.b16 %v58
  %v139 = vunpack.c.l.b16 %v59
  %v140 = vunpack.c.l.b16 %v60
  %v141 = vunpack.c.l.b16 %v61
  %v142 = vunpack.c.l.b16 %v62
  %v143 = vunpack.c.l.b16 %v63
  %v144 = vpack.c.b16 %v129, %v128
  %v145 = vpack.c.b16 %v131, %v130
  %v146 = vpack.c.b16 %v133, %v132
  %v147 = vpack.c.b16 %v135, %v134
  %v148 = vpack.c.b16 %v137, %v136
  %v149 = vpack.c.b16 %v139, %v138
  %v150 = vpack.c.b16 %v141, %v140
  %v151 = vpack.c.b16 %v143, %v142
  %160 = vmatpush.bf16.msra.mxu0 %v151
  %161 = vmatpush.bf16.msra.mxu0 %v150
  %162 = vmatpush.bf16.msra.mxu0 %v149
  %163 = vmatpush.bf16.msra.mxu0 %v148
  %164 = vmatpush.bf16.msra.mxu0 %v147
  %165 = vmatpush.bf16.msra.mxu0 %v146
  %166 = vmatpush.bf16.msra.mxu0 %v145
  %167 = vmatpush.bf16.msra.mxu0 %v144
  %168 = vmatmul.bf16.gmra.mxu0 %v96
  %v169 = vpop.f32.mrf.mxu0
  %v170 = vadd.f32 0.0, %v169
  %v171 = vpop.f32.mrf.mxu0
  %v172 = vadd.f32 0.0, %v171
  %173 = vmatmul.bf16.gmra.mxu0 %v97
  %v174 = vpop.f32.mrf.mxu0
  %v175 = vadd.f32 0.0, %v174
  %v176 = vpop.f32.mrf.mxu0
  %v177 = vadd.f32 0.0, %v176
  %178 = vmatmul.bf16.gmra.mxu0 %v98
  %v179 = vpop.f32.mrf.mxu0
  %v180 = vadd.f32 0.0, %v179
  %v181 = vpop.f32.mrf.mxu0
  %v182 = vadd.f32 0.0, %v181
  %183 = vmatmul.bf16.gmra.mxu0 %v99
  %v184 = vpop.f32.mrf.mxu0
  %v185 = vadd.f32 0.0, %v184
  %v186 = vpop.f32.mrf.mxu0
  %v187 = vadd.f32 0.0, %v186
  %188 = vmatmul.bf16.gmra.mxu0 %v100
  %v189 = vpop.f32.mrf.mxu0
  %v190 = vadd.f32 0.0, %v189
  %v191 = vpop.f32.mrf.mxu0
  %v192 = vadd.f32 0.0, %v191
  %193 = vmatmul.bf16.gmra.mxu0 %v101
  %v194 = vpop.f32.mrf.mxu0
  %v195 = vadd.f32 0.0, %v194
  %v196 = vpop.f32.mrf.mxu0
  %v197 = vadd.f32 0.0, %v196
  %198 = vmatmul.bf16.gmra.mxu0 %v102
  %v199 = vpop.f32.mrf.mxu0
  %v200 = vadd.f32 0.0, %v199
  %v201 = vpop.f32.mrf.mxu0
  %v202 = vadd.f32 0.0, %v201
  %203 = vmatmul.bf16.gmra.mxu0 %v103
  %v204 = vpop.f32.mrf.mxu0
  %v205 = vadd.f32 0.0, %v204
  %v206 = vpop.f32.mrf.mxu0
  %v207 = vadd.f32 0.0, %v206
  %208 = vdwg.mxu0
  %v209 = vld [vmem:[%s5] sm:$0xff]
  %v210 = vld [vmem:[%s5 + $0x8] sm:$0xff]
  %v211 = vld [vmem:[%s5 + $0x10] sm:$0xff]
  %v212 = vld [vmem:[%s5 + $0x18] sm:$0xff]
  %v213 = vld [vmem:[%s5 + $0x20] sm:$0xff]
  %v214 = vld [vmem:[%s5 + $0x28] sm:$0xff]
  %v215 = vld [vmem:[%s5 + $0x30] sm:$0xff]
  %v216 = vld [vmem:[%s5 + $0x38] sm:$0xff]
  %v217 = vld [vmem:[%s5 + $0x40] sm:$0xff]
  %v218 = vld [vmem:[%s5 + $0x48] sm:$0xff]
  %v219 = vld [vmem:[%s5 + $0x50] sm:$0xff]
  %v220 = vld [vmem:[%s5 + $0x58] sm:$0xff]
  %v221 = vld [vmem:[%s5 + $0x60] sm:$0xff]
  %v222 = vld [vmem:[%s5 + $0x68] sm:$0xff]
  %v223 = vld [vmem:[%s5 + $0x70] sm:$0xff]
  %v224 = vld [vmem:[%s5 + $0x78] sm:$0xff]
  %226 = vset.pattern.permute.xlu0 0
  %227 = vperm.xlu0 %226, %v209
  %v228 = vpop.permute.xlu0 %227
  %231 = vset.pattern.permute.xlu0 0
  %232 = vperm.xlu0 %231, %v210
  %v233 = vpop.permute.xlu0 %232
  %236 = vset.pattern.permute.xlu0 0
  %237 = vperm.xlu0 %236, %v211
  %v238 = vpop.permute.xlu0 %237
  %241 = vset.pattern.permute.xlu0 0
  %242 = vperm.xlu0 %241, %v212
  %v243 = vpop.permute.xlu0 %242
  %246 = vset.pattern.permute.xlu0 0
  %247 = vperm.xlu0 %246, %v213
  %v248 = vpop.permute.xlu0 %247
  %251 = vset.pattern.permute.xlu0 0
  %252 = vperm.xlu0 %251, %v214
  %v253 = vpop.permute.xlu0 %252
  %256 = vset.pattern.permute.xlu0 0
  %257 = vperm.xlu0 %256, %v215
  %v258 = vpop.permute.xlu0 %257
  %261 = vset.pattern.permute.xlu0 0
  %262 = vperm.xlu0 %261, %v216
  %v263 = vpop.permute.xlu0 %262
  %266 = vset.pattern.permute.xlu0 0
  %267 = vperm.xlu0 %266, %v217
  %v268 = vpop.permute.xlu0 %267
  %271 = vset.pattern.permute.xlu0 0
  %272 = vperm.xlu0 %271, %v218
  %v273 = vpop.permute.xlu0 %272
  %276 = vset.pattern.permute.xlu0 0
  %277 = vperm.xlu0 %276, %v219
  %v278 = vpop.permute.xlu0 %277
  %281 = vset.pattern.permute.xlu0 0
  %282 = vperm.xlu0 %281, %v220
  %v283 = vpop.permute.xlu0 %282
  %286 = vset.pattern.permute.xlu0 0
  %287 = vperm.xlu0 %286, %v221
  %v288 = vpop.permute.xlu0 %287
  %291 = vset.pattern.permute.xlu0 0
  %292 = vperm.xlu0 %291, %v222
  %v293 = vpop.permute.xlu0 %292
  %296 = vset.pattern.permute.xlu0 0
  %297 = vperm.xlu0 %296, %v223
  %v298 = vpop.permute.xlu0 %297
  %301 = vset.pattern.permute.xlu0 0
  %302 = vperm.xlu0 %301, %v224
  %v303 = vpop.permute.xlu0 %302
  %v305 = vmul.f32 %v170, %v228
  %v306 = vmul.f32 %v172, %v233
  %v307 = vmul.f32 %v175, %v238
  %v308 = vmul.f32 %v177, %v243
  %v309 = vmul.f32 %v180, %v248
  %v310 = vmul.f32 %v182, %v253
  %v311 = vmul.f32 %v185, %v258
  %v312 = vmul.f32 %v187, %v263
  %v313 = vmul.f32 %v190, %v268
  %v314 = vmul.f32 %v192, %v273
  %v315 = vmul.f32 %v195, %v278
  %v316 = vmul.f32 %v197, %v283
  %v317 = vmul.f32 %v200, %v288
  %v318 = vmul.f32 %v202, %v293
  %v319 = vmul.f32 %v205, %v298
  %v320 = vmul.f32 %v207, %v303
  %v321 = vpack.c.bf16 %v306, %v305
  %v322 = vpack.c.bf16 %v308, %v307
  %v323 = vpack.c.bf16 %v310, %v309
  %v324 = vpack.c.bf16 %v312, %v311
  %v325 = vpack.c.bf16 %v314, %v313
  %v326 = vpack.c.bf16 %v316, %v315
  %v327 = vpack.c.bf16 %v318, %v317
  %v328 = vpack.c.bf16 %v320, %v319
  %v329 = vld [vmem:[%s0] sm:$0xf]
  %v330 = vld [vmem:[%s0 + $0x4] sm:$0xf]
  %v331 = vld [vmem:[%s0 + $0x8] sm:$0xf]
  %v332 = vld [vmem:[%s0 + $0xc] sm:$0xf]
  %v333 = vld [vmem:[%s0 + $0x10] sm:$0xf]
  %v334 = vld [vmem:[%s0 + $0x14] sm:$0xf]
  %v335 = vld [vmem:[%s0 + $0x18] sm:$0xf]
  %v336 = vld [vmem:[%s0 + $0x1c] sm:$0xf]
  %v337 = vld [vmem:[%s0 + $0x20] sm:$0xf]
  %v338 = vld [vmem:[%s0 + $0x24] sm:$0xf]
  %v339 = vld [vmem:[%s0 + $0x28] sm:$0xf]
  %v340 = vld [vmem:[%s0 + $0x2c] sm:$0xf]
  %v341 = vld [vmem:[%s0 + $0x30] sm:$0xf]
  %v342 = vld [vmem:[%s0 + $0x34] sm:$0xf]
  %v343 = vld [vmem:[%s0 + $0x38] sm:$0xf]
  %v344 = vld [vmem:[%s0 + $0x3c] sm:$0xf]
  %v361 = vunpack.c.l.b16 %v329
  %v362 = vunpack.c.l.b16 %v330
  %v363 = vunpack.c.l.b16 %v331
  %v364 = vunpack.c.l.b16 %v332
  %v365 = vunpack.c.l.b16 %v333
  %v366 = vunpack.c.l.b16 %v334
  %v367 = vunpack.c.l.b16 %v335
  %v368 = vunpack.c.l.b16 %v336
  %v369 = vunpack.c.l.b16 %v337
  %v370 = vunpack.c.l.b16 %v338
  %v371 = vunpack.c.l.b16 %v339
  %v372 = vunpack.c.l.b16 %v340
  %v373 = vunpack.c.l.b16 %v341
  %v374 = vunpack.c.l.b16 %v342
  %v375 = vunpack.c.l.b16 %v343
  %v376 = vunpack.c.l.b16 %v344
  %v377 = vpack.c.b16 %v362, %v361
  %v378 = vpack.c.b16 %v364, %v363
  %v379 = vpack.c.b16 %v366, %v365
  %v380 = vpack.c.b16 %v368, %v367
  %v381 = vpack.c.b16 %v370, %v369
  %v382 = vpack.c.b16 %v372, %v371
  %v383 = vpack.c.b16 %v374, %v373
  %v384 = vpack.c.b16 %v376, %v375
  %393 = vmatpush.bf16.msra.mxu0 %v328
  %394 = vmatpush.bf16.msra.mxu0 %v327
  %395 = vmatpush.bf16.msra.mxu0 %v326
  %396 = vmatpush.bf16.msra.mxu0 %v325
  %397 = vmatpush.bf16.msra.mxu0 %v324
  %398 = vmatpush.bf16.msra.mxu0 %v323
  %399 = vmatpush.bf16.msra.mxu0 %v322
  %400 = vmatpush.bf16.msra.mxu0 %v321
  %401 = vmatmul.bf16.gmra.mxu0 %v377
  %v402 = vpop.f32.mrf.mxu0
  %v403 = vadd.f32 0.0, %v402
  %v404 = vpop.f32.mrf.mxu0
  %v405 = vadd.f32 0.0, %v404
  %406 = vmatmul.bf16.gmra.mxu0 %v378
  %v407 = vpop.f32.mrf.mxu0
  %v408 = vadd.f32 0.0, %v407
  %v409 = vpop.f32.mrf.mxu0
  %v410 = vadd.f32 0.0, %v409
  %411 = vmatmul.bf16.gmra.mxu0 %v379
  %v412 = vpop.f32.mrf.mxu0
  %v413 = vadd.f32 0.0, %v412
  %v414 = vpop.f32.mrf.mxu0
  %v415 = vadd.f32 0.0, %v414
  %416 = vmatmul.bf16.gmra.mxu0 %v380
  %v417 = vpop.f32.mrf.mxu0
  %v418 = vadd.f32 0.0, %v417
  %v419 = vpop.f32.mrf.mxu0
  %v420 = vadd.f32 0.0, %v419
  %421 = vmatmul.bf16.gmra.mxu0 %v381
  %v422 = vpop.f32.mrf.mxu0
  %v423 = vadd.f32 0.0, %v422
  %v424 = vpop.f32.mrf.mxu0
  %v425 = vadd.f32 0.0, %v424
  %426 = vmatmul.bf16.gmra.mxu0 %v382
  %v427 = vpop.f32.mrf.mxu0
  %v428 = vadd.f32 0.0, %v427
  %v429 = vpop.f32.mrf.mxu0
  %v430 = vadd.f32 0.0, %v429
  %431 = vmatmul.bf16.gmra.mxu0 %v383
  %v432 = vpop.f32.mrf.mxu0
  %v433 = vadd.f32 0.0, %v432
  %v434 = vpop.f32.mrf.mxu0
  %v435 = vadd.f32 0.0, %v434
  %436 = vmatmul.bf16.gmra.mxu0 %v384
  %v437 = vpop.f32.mrf.mxu0
  %v438 = vadd.f32 0.0, %v437
  %v439 = vpop.f32.mrf.mxu0
  %v440 = vadd.f32 0.0, %v439
  %441 = vdwg.mxu0
  %v442 = vmul.f32 %v403, %v228
  %v443 = vmul.f32 %v405, %v233
  %v444 = vmul.f32 %v408, %v238
  %v445 = vmul.f32 %v410, %v243
  %v446 = vmul.f32 %v413, %v248
  %v447 = vmul.f32 %v415, %v253
  %v448 = vmul.f32 %v418, %v258
  %v449 = vmul.f32 %v420, %v263
  %v450 = vmul.f32 %v423, %v268
  %v451 = vmul.f32 %v425, %v273
  %v452 = vmul.f32 %v428, %v278
  %v453 = vmul.f32 %v430, %v283
  %v454 = vmul.f32 %v433, %v288
  %v455 = vmul.f32 %v435, %v293
  %v456 = vmul.f32 %v438, %v298
  %v457 = vmul.f32 %v440, %v303
  %v458 = vld [vmem:[%s7] sm:$0x1]
  %v460 = vperm.slane %v458, 0
  %v462 = vadd.f32 %v442, %v460
  %v463 = vadd.f32 %v443, %v460
  %v464 = vadd.f32 %v444, %v460
  %v465 = vadd.f32 %v445, %v460
  %v466 = vadd.f32 %v446, %v460
  %v467 = vadd.f32 %v447, %v460
  %v468 = vadd.f32 %v448, %v460
  %v469 = vadd.f32 %v449, %v460
  %v470 = vadd.f32 %v450, %v460
  %v471 = vadd.f32 %v451, %v460
  %v472 = vadd.f32 %v452, %v460
  %v473 = vadd.f32 %v453, %v460
  %v474 = vadd.f32 %v454, %v460
  %v475 = vadd.f32 %v455, %v460
  %v476 = vadd.f32 %v456, %v460
  %v477 = vadd.f32 %v457, %v460
  %v478 = vmax.f32 %v462, 0.0
  %v479 = vmax.f32 %v463, 0.0
  %v480 = vmax.f32 %v464, 0.0
  %v481 = vmax.f32 %v465, 0.0
  %v482 = vmax.f32 %v466, 0.0
  %v483 = vmax.f32 %v467, 0.0
  %v484 = vmax.f32 %v468, 0.0
  %v485 = vmax.f32 %v469, 0.0
  %v486 = vmax.f32 %v470, 0.0
  %v487 = vmax.f32 %v471, 0.0
  %v488 = vmax.f32 %v472, 0.0
  %v489 = vmax.f32 %v473, 0.0
  %v490 = vmax.f32 %v474, 0.0
  %v491 = vmax.f32 %v475, 0.0
  %v492 = vmax.f32 %v476, 0.0
  %v493 = vmax.f32 %v477, 0.0
  %v494 = vpack.c.bf16 %v479, %v478
  %v495 = vpack.c.bf16 %v481, %v480
  %v496 = vpack.c.bf16 %v483, %v482
  %v497 = vpack.c.bf16 %v485, %v484
  %v498 = vpack.c.bf16 %v487, %v486
  %v499 = vpack.c.bf16 %v489, %v488
  %v500 = vpack.c.bf16 %v491, %v490
  %v501 = vpack.c.bf16 %v493, %v492
  %v502 = vld [vmem:[%s4] sm:$0xf]
  %v503 = vld [vmem:[%s4 + $0x4] sm:$0xf]
  %v504 = vld [vmem:[%s4 + $0x8] sm:$0xf]
  %v505 = vld [vmem:[%s4 + $0xc] sm:$0xf]
  %v506 = vld [vmem:[%s4 + $0x10] sm:$0xf]
  %v507 = vld [vmem:[%s4 + $0x14] sm:$0xf]
  %v508 = vld [vmem:[%s4 + $0x18] sm:$0xf]
  %v509 = vld [vmem:[%s4 + $0x1c] sm:$0xf]
  %v510 = vld [vmem:[%s4 + $0x20] sm:$0xf]
  %v511 = vld [vmem:[%s4 + $0x24] sm:$0xf]
  %v512 = vld [vmem:[%s4 + $0x28] sm:$0xf]
  %v513 = vld [vmem:[%s4 + $0x2c] sm:$0xf]
  %v514 = vld [vmem:[%s4 + $0x30] sm:$0xf]
  %v515 = vld [vmem:[%s4 + $0x34] sm:$0xf]
  %v516 = vld [vmem:[%s4 + $0x38] sm:$0xf]
  %v517 = vld [vmem:[%s4 + $0x3c] sm:$0xf]
  %v534 = vunpack.c.l.b16 %v502
  %v535 = vunpack.c.l.b16 %v503
  %v536 = vunpack.c.l.b16 %v504
  %v537 = vunpack.c.l.b16 %v505
  %v538 = vunpack.c.l.b16 %v506
  %v539 = vunpack.c.l.b16 %v507
  %v540 = vunpack.c.l.b16 %v508
  %v541 = vunpack.c.l.b16 %v509
  %v542 = vunpack.c.l.b16 %v510
  %v543 = vunpack.c.l.b16 %v511
  %v544 = vunpack.c.l.b16 %v512
  %v545 = vunpack.c.l.b16 %v513
  %v546 = vunpack.c.l.b16 %v514
  %v547 = vunpack.c.l.b16 %v515
  %v548 = vunpack.c.l.b16 %v516
  %v549 = vunpack.c.l.b16 %v517
  %v550 = vpack.c.b16 %v535, %v534
  %v551 = vpack.c.b16 %v537, %v536
  %v552 = vpack.c.b16 %v539, %v538
  %v553 = vpack.c.b16 %v541, %v540
  %v554 = vpack.c.b16 %v543, %v542
  %v555 = vpack.c.b16 %v545, %v544
  %v556 = vpack.c.b16 %v547, %v546
  %v557 = vpack.c.b16 %v549, %v548
  %566 = vmatpush.bf16.msra.mxu0 %v557
  %567 = vmatpush.bf16.msra.mxu0 %v556
  %568 = vmatpush.bf16.msra.mxu0 %v555
  %569 = vmatpush.bf16.msra.mxu0 %v554
  %570 = vmatpush.bf16.msra.mxu0 %v553
  %571 = vmatpush.bf16.msra.mxu0 %v552
  %572 = vmatpush.bf16.msra.mxu0 %v551
  %573 = vmatpush.bf16.msra.mxu0 %v550
  %574 = vmatmul.bf16.gmra.mxu0 %v494
  %v575 = vpop.f32.mrf.mxu0
  %v576 = vadd.f32 0.0, %v575
  %v577 = vpop.f32.mrf.mxu0
  %v578 = vadd.f32 0.0, %v577
  %579 = vmatmul.bf16.gmra.mxu0 %v495
  %v580 = vpop.f32.mrf.mxu0
  %v581 = vadd.f32 0.0, %v580
  %v582 = vpop.f32.mrf.mxu0
  %v583 = vadd.f32 0.0, %v582
  %584 = vmatmul.bf16.gmra.mxu0 %v496
  %v585 = vpop.f32.mrf.mxu0
  %v586 = vadd.f32 0.0, %v585
  %v587 = vpop.f32.mrf.mxu0
  %v588 = vadd.f32 0.0, %v587
  %589 = vmatmul.bf16.gmra.mxu0 %v497
  %v590 = vpop.f32.mrf.mxu0
  %v591 = vadd.f32 0.0, %v590
  %v592 = vpop.f32.mrf.mxu0
  %v593 = vadd.f32 0.0, %v592
  %594 = vmatmul.bf16.gmra.mxu0 %v498
  %v595 = vpop.f32.mrf.mxu0
  %v596 = vadd.f32 0.0, %v595
  %v597 = vpop.f32.mrf.mxu0
  %v598 = vadd.f32 0.0, %v597
  %599 = vmatmul.bf16.gmra.mxu0 %v499
  %v600 = vpop.f32.mrf.mxu0
  %v601 = vadd.f32 0.0, %v600
  %v602 = vpop.f32.mrf.mxu0
  %v603 = vadd.f32 0.0, %v602
  %604 = vmatmul.bf16.gmra.mxu0 %v500
  %v605 = vpop.f32.mrf.mxu0
  %v606 = vadd.f32 0.0, %v605
  %v607 = vpop.f32.mrf.mxu0
  %v608 = vadd.f32 0.0, %v607
  %609 = vmatmul.bf16.gmra.mxu0 %v501
  %v610 = vpop.f32.mrf.mxu0
  %v611 = vadd.f32 0.0, %v610
  %v612 = vpop.f32.mrf.mxu0
  %v613 = vadd.f32 0.0, %v612
  %614 = vdwg.mxu0
  %v615 = vld [vmem:[%s6] sm:$0xff]
  %v616 = vld [vmem:[%s6 + $0x8] sm:$0xff]
  %v617 = vld [vmem:[%s6 + $0x10] sm:$0xff]
  %v618 = vld [vmem:[%s6 + $0x18] sm:$0xff]
  %v619 = vld [vmem:[%s6 + $0x20] sm:$0xff]
  %v620 = vld [vmem:[%s6 + $0x28] sm:$0xff]
  %v621 = vld [vmem:[%s6 + $0x30] sm:$0xff]
  %v622 = vld [vmem:[%s6 + $0x38] sm:$0xff]
  %v623 = vld [vmem:[%s6 + $0x40] sm:$0xff]
  %v624 = vld [vmem:[%s6 + $0x48] sm:$0xff]
  %v625 = vld [vmem:[%s6 + $0x50] sm:$0xff]
  %v626 = vld [vmem:[%s6 + $0x58] sm:$0xff]
  %v627 = vld [vmem:[%s6 + $0x60] sm:$0xff]
  %v628 = vld [vmem:[%s6 + $0x68] sm:$0xff]
  %v629 = vld [vmem:[%s6 + $0x70] sm:$0xff]
  %v630 = vld [vmem:[%s6 + $0x78] sm:$0xff]
  %632 = vset.pattern.permute.xlu0 0
  %633 = vperm.xlu0 %632, %v615
  %v634 = vpop.permute.xlu0 %633
  %637 = vset.pattern.permute.xlu0 0
  %638 = vperm.xlu0 %637, %v616
  %v639 = vpop.permute.xlu0 %638
  %642 = vset.pattern.permute.xlu0 0
  %643 = vperm.xlu0 %642, %v617
  %v644 = vpop.permute.xlu0 %643
  %647 = vset.pattern.permute.xlu0 0
  %648 = vperm.xlu0 %647, %v618
  %v649 = vpop.permute.xlu0 %648
  %652 = vset.pattern.permute.xlu0 0
  %653 = vperm.xlu0 %652, %v619
  %v654 = vpop.permute.xlu0 %653
  %657 = vset.pattern.permute.xlu0 0
  %658 = vperm.xlu0 %657, %v620
  %v659 = vpop.permute.xlu0 %658
  %662 = vset.pattern.permute.xlu0 0
  %663 = vperm.xlu0 %662, %v621
  %v664 = vpop.permute.xlu0 %663
  %667 = vset.pattern.permute.xlu0 0
  %668 = vperm.xlu0 %667, %v622
  %v669 = vpop.permute.xlu0 %668
  %672 = vset.pattern.permute.xlu0 0
  %673 = vperm.xlu0 %672, %v623
  %v674 = vpop.permute.xlu0 %673
  %677 = vset.pattern.permute.xlu0 0
  %678 = vperm.xlu0 %677, %v624
  %v679 = vpop.permute.xlu0 %678
  %682 = vset.pattern.permute.xlu0 0
  %683 = vperm.xlu0 %682, %v625
  %v684 = vpop.permute.xlu0 %683
  %687 = vset.pattern.permute.xlu0 0
  %688 = vperm.xlu0 %687, %v626
  %v689 = vpop.permute.xlu0 %688
  %692 = vset.pattern.permute.xlu0 0
  %693 = vperm.xlu0 %692, %v627
  %v694 = vpop.permute.xlu0 %693
  %697 = vset.pattern.permute.xlu0 0
  %698 = vperm.xlu0 %697, %v628
  %v699 = vpop.permute.xlu0 %698
  %702 = vset.pattern.permute.xlu0 0
  %703 = vperm.xlu0 %702, %v629
  %v704 = vpop.permute.xlu0 %703
  %707 = vset.pattern.permute.xlu0 0
  %708 = vperm.xlu0 %707, %v630
  %v709 = vpop.permute.xlu0 %708
  %v711 = vmul.f32 %v576, %v634
  %v712 = vmul.f32 %v578, %v639
  %v713 = vmul.f32 %v581, %v644
  %v714 = vmul.f32 %v583, %v649
  %v715 = vmul.f32 %v586, %v654
  %v716 = vmul.f32 %v588, %v659
  %v717 = vmul.f32 %v591, %v664
  %v718 = vmul.f32 %v593, %v669
  %v719 = vmul.f32 %v596, %v674
  %v720 = vmul.f32 %v598, %v679
  %v721 = vmul.f32 %v601, %v684
  %v722 = vmul.f32 %v603, %v689
  %v723 = vmul.f32 %v606, %v694
  %v724 = vmul.f32 %v608, %v699
  %v725 = vmul.f32 %v611, %v704
  %v726 = vmul.f32 %v613, %v709
  %v727 = vpack.c.bf16 %v712, %v711
  %v728 = vpack.c.bf16 %v714, %v713
  %v729 = vpack.c.bf16 %v716, %v715
  %v730 = vpack.c.bf16 %v718, %v717
  %v731 = vpack.c.bf16 %v720, %v719
  %v732 = vpack.c.bf16 %v722, %v721
  %v733 = vpack.c.bf16 %v724, %v723
  %v734 = vpack.c.bf16 %v726, %v725
  %v735 = vld [vmem:[%s1] sm:$0xf]
  %v736 = vld [vmem:[%s1 + $0x4] sm:$0xf]
  %v737 = vld [vmem:[%s1 + $0x8] sm:$0xf]
  %v738 = vld [vmem:[%s1 + $0xc] sm:$0xf]
  %v739 = vld [vmem:[%s1 + $0x10] sm:$0xf]
  %v740 = vld [vmem:[%s1 + $0x14] sm:$0xf]
  %v741 = vld [vmem:[%s1 + $0x18] sm:$0xf]
  %v742 = vld [vmem:[%s1 + $0x1c] sm:$0xf]
  %v743 = vld [vmem:[%s1 + $0x20] sm:$0xf]
  %v744 = vld [vmem:[%s1 + $0x24] sm:$0xf]
  %v745 = vld [vmem:[%s1 + $0x28] sm:$0xf]
  %v746 = vld [vmem:[%s1 + $0x2c] sm:$0xf]
  %v747 = vld [vmem:[%s1 + $0x30] sm:$0xf]
  %v748 = vld [vmem:[%s1 + $0x34] sm:$0xf]
  %v749 = vld [vmem:[%s1 + $0x38] sm:$0xf]
  %v750 = vld [vmem:[%s1 + $0x3c] sm:$0xf]
  %v767 = vunpack.c.l.b16 %v735
  %v768 = vunpack.c.l.b16 %v736
  %v769 = vunpack.c.l.b16 %v737
  %v770 = vunpack.c.l.b16 %v738
  %v771 = vunpack.c.l.b16 %v739
  %v772 = vunpack.c.l.b16 %v740
  %v773 = vunpack.c.l.b16 %v741
  %v774 = vunpack.c.l.b16 %v742
  %v775 = vunpack.c.l.b16 %v743
  %v776 = vunpack.c.l.b16 %v744
  %v777 = vunpack.c.l.b16 %v745
  %v778 = vunpack.c.l.b16 %v746
  %v779 = vunpack.c.l.b16 %v747
  %v780 = vunpack.c.l.b16 %v748
  %v781 = vunpack.c.l.b16 %v749
  %v782 = vunpack.c.l.b16 %v750
  %v783 = vpack.c.b16 %v768, %v767
  %v784 = vpack.c.b16 %v770, %v769
  %v785 = vpack.c.b16 %v772, %v771
  %v786 = vpack.c.b16 %v774, %v773
  %v787 = vpack.c.b16 %v776, %v775
  %v788 = vpack.c.b16 %v778, %v777
  %v789 = vpack.c.b16 %v780, %v779
  %v790 = vpack.c.b16 %v782, %v781
  %799 = vmatpush.bf16.msra.mxu0 %v734
  %800 = vmatpush.bf16.msra.mxu0 %v733
  %801 = vmatpush.bf16.msra.mxu0 %v732
  %802 = vmatpush.bf16.msra.mxu0 %v731
  %803 = vmatpush.bf16.msra.mxu0 %v730
  %804 = vmatpush.bf16.msra.mxu0 %v729
  %805 = vmatpush.bf16.msra.mxu0 %v728
  %806 = vmatpush.bf16.msra.mxu0 %v727
  %807 = vmatmul.bf16.gmra.mxu0 %v783
  %v808 = vpop.f32.mrf.mxu0
  %v809 = vadd.f32 0.0, %v808
  %v810 = vpop.f32.mrf.mxu0
  %v811 = vadd.f32 0.0, %v810
  %812 = vmatmul.bf16.gmra.mxu0 %v784
  %v813 = vpop.f32.mrf.mxu0
  %v814 = vadd.f32 0.0, %v813
  %v815 = vpop.f32.mrf.mxu0
  %v816 = vadd.f32 0.0, %v815
  %817 = vmatmul.bf16.gmra.mxu0 %v785
  %v818 = vpop.f32.mrf.mxu0
  %v819 = vadd.f32 0.0, %v818
  %v820 = vpop.f32.mrf.mxu0
  %v821 = vadd.f32 0.0, %v820
  %822 = vmatmul.bf16.gmra.mxu0 %v786
  %v823 = vpop.f32.mrf.mxu0
  %v824 = vadd.f32 0.0, %v823
  %v825 = vpop.f32.mrf.mxu0
  %v826 = vadd.f32 0.0, %v825
  %827 = vmatmul.bf16.gmra.mxu0 %v787
  %v828 = vpop.f32.mrf.mxu0
  %v829 = vadd.f32 0.0, %v828
  %v830 = vpop.f32.mrf.mxu0
  %v831 = vadd.f32 0.0, %v830
  %832 = vmatmul.bf16.gmra.mxu0 %v788
  %v833 = vpop.f32.mrf.mxu0
  %v834 = vadd.f32 0.0, %v833
  %v835 = vpop.f32.mrf.mxu0
  %v836 = vadd.f32 0.0, %v835
  %837 = vmatmul.bf16.gmra.mxu0 %v789
  %v838 = vpop.f32.mrf.mxu0
  %v839 = vadd.f32 0.0, %v838
  %v840 = vpop.f32.mrf.mxu0
  %v841 = vadd.f32 0.0, %v840
  %842 = vmatmul.bf16.gmra.mxu0 %v790
  %v843 = vpop.f32.mrf.mxu0
  %v844 = vadd.f32 0.0, %v843
  %v845 = vpop.f32.mrf.mxu0
  %v846 = vadd.f32 0.0, %v845
  %847 = vdwg.mxu0
  %v848 = vmul.f32 %v809, %v634
  %v849 = vmul.f32 %v811, %v639
  %v850 = vmul.f32 %v814, %v644
  %v851 = vmul.f32 %v816, %v649
  %v852 = vmul.f32 %v819, %v654
  %v853 = vmul.f32 %v821, %v659
  %v854 = vmul.f32 %v824, %v664
  %v855 = vmul.f32 %v826, %v669
  %v856 = vmul.f32 %v829, %v674
  %v857 = vmul.f32 %v831, %v679
  %v858 = vmul.f32 %v834, %v684
  %v859 = vmul.f32 %v836, %v689
  %v860 = vmul.f32 %v839, %v694
  %v861 = vmul.f32 %v841, %v699
  %v862 = vmul.f32 %v844, %v704
  %v863 = vmul.f32 %v846, %v709
  %v864 = vld [vmem:[%s8] sm:$0x1]
  %v866 = vperm.slane %v864, 0
  %v868 = vadd.f32 %v848, %v866
  %v869 = vadd.f32 %v849, %v866
  %v870 = vadd.f32 %v850, %v866
  %v871 = vadd.f32 %v851, %v866
  %v872 = vadd.f32 %v852, %v866
  %v873 = vadd.f32 %v853, %v866
  %v874 = vadd.f32 %v854, %v866
  %v875 = vadd.f32 %v855, %v866
  %v876 = vadd.f32 %v856, %v866
  %v877 = vadd.f32 %v857, %v866
  %v878 = vadd.f32 %v858, %v866
  %v879 = vadd.f32 %v859, %v866
  %v880 = vadd.f32 %v860, %v866
  %v881 = vadd.f32 %v861, %v866
  %v882 = vadd.f32 %v862, %v866
  %v883 = vadd.f32 %v863, %v866
  %884 = vst [vmem:[%s9] sm:$0xff] %v868
  %885 = vst [vmem:[%s9 + $0x8] sm:$0xff] %v869
  %886 = vst [vmem:[%s9 + $0x10] sm:$0xff] %v870
  %887 = vst [vmem:[%s9 + $0x18] sm:$0xff] %v871
  %888 = vst [vmem:[%s9 + $0x20] sm:$0xff] %v872
  %889 = vst [vmem:[%s9 + $0x28] sm:$0xff] %v873
  %890 = vst [vmem:[%s9 + $0x30] sm:$0xff] %v874
  %891 = vst [vmem:[%s9 + $0x38] sm:$0xff] %v875
  %892 = vst [vmem:[%s9 + $0x40] sm:$0xff] %v876
  %893 = vst [vmem:[%s9 + $0x48] sm:$0xff] %v877
  %894 = vst [vmem:[%s9 + $0x50] sm:$0xff] %v878
  %895 = vst [vmem:[%s9 + $0x58] sm:$0xff] %v879
  %896 = vst [vmem:[%s9 + $0x60] sm:$0xff] %v880
  %897 = vst [vmem:[%s9 + $0x68] sm:$0xff] %v881
  %898 = vst [vmem:[%s9 + $0x70] sm:$0xff] %v882
  %899 = vst [vmem:[%s9 + $0x78] sm:$0xff] %v883
  // Predicated region
  $region38: #{gnn_forward.1} parent=0 // pred_check
    _
  $region39: #{gnn_forward.1} parent=0 // pred_check_branch
    %901 = sbr.rel (0) target = $region41
  $region40: #{gnn_forward.1} parent=0 // pred_region
    _
  $region41: #{gnn_forward.1} parent=0 // pred_fallthru
    _
  // Predicated region
  $region42: #{gnn_forward.1} parent=0 // pred_check
    _
  $region43: #{gnn_forward.1} parent=0 // pred_check_branch
    %903 = sbr.rel (0) target = $region45
  $region44: #{gnn_forward.1} parent=0 // pred_region
    _
  $region45: #{gnn_forward.1} parent=0 // pred_fallthru
    _

</llo_original>
